<compile_context>
chip_gen: v7x
topology: tpu7x:2x2x1
jax: 0.10.0
libtpu: 0.0.40
codegen_flags: <defaults>
</compile_context>

<pallas_src>
import functools

import numpy as np
import jax
import jax.numpy as jnp
from jax import lax
from jax.experimental import pallas as pl
from jax.experimental.pallas import tpu as pltpu


def _round_up(x, m):
    return ((x + m - 1) // m) * m


def _mask_cache_kernel(xyz_ref, dens_ref, out_ref, *, D, H, W, W_pad, DH_pad,
                       scale, offset, act_shift, thres):
    # xyz_ref:  (3, TN)          f32  query points, rows = (x->D, y->H, z->W)
    # dens_ref: (DH_pad, W_pad)  f32  pooled density, dens[d*H+h, w], zero-padded
    # out_ref:  (1, TN)          f32  mask row (1.0 where alpha >= thres)
    tn = xyz_ref.shape[1]
    sd, sh, sw = scale
    od, oh, ow = offset

    # Continuous voxel-space coordinates, points on the lane axis.  The PyTorch
    # .flip(-1) + grid_sample(align_corners=True) convention folds into:
    # x -> D axis, y -> H axis, z -> W axis, coord = p * scale + offset.
    fd = xyz_ref[0:1, :] * sd + od          # (1, TN)
    fh = xyz_ref[1:2, :] * sh + oh
    fw = xyz_ref[2:3, :] * sw + ow

    def corners(fx, size):
        x0f = jnp.floor(fx)
        x0 = x0f.astype(jnp.int32)
        frac = fx - x0f
        res = []
        for xi, wi in ((x0, 1.0 - frac), (x0 + 1, frac)):
            valid = (xi >= 0) & (xi < size)          # grid_sample padding 'zeros'
            res.append((jnp.clip(xi, 0, size - 1), jnp.where(valid, wi, 0.0)))
        return res

    dcs = corners(fd, D)
    hcs = corners(fh, H)
    wcs = corners(fw, W)

    # W-axis interpolation weights: (W_pad, TN), two nonzeros per column.
    w_iota = lax.broadcasted_iota(jnp.int32, (W_pad, 1), 0)
    one_w = (jnp.where(w_iota == wcs[0][0], wcs[0][1], 0.0)
             + jnp.where(w_iota == wcs[1][0], wcs[1][1], 0.0))

    # Interpolate along W for every (d, h) cell with a single MXU matmul.
    s1 = jnp.dot(dens_ref[...], one_w,
                 preferred_element_type=jnp.float32)      # (DH_pad, TN)

    # Combined D/H corner weights along the sublane (d*H + h) axis.  Clamped
    # duplicate corners always carry zero weight, so summing terms is exact.
    dh_iota = lax.broadcasted_iota(jnp.int32, (DH_pad, 1), 0)
    w_dh = jnp.zeros((DH_pad, tn), jnp.float32)
    for dc, wd in dcs:
        for hc, wh in hcs:
            w_dh = w_dh + jnp.where(dh_iota == dc * H + hc, wd * wh, 0.0)

    samp = jnp.sum(s1 * w_dh, axis=0, keepdims=True)      # (1, TN)

    alpha = 1.0 - jnp.exp(-jnp.logaddexp(samp + act_shift, 0.0))
    out_ref[...] = (alpha >= thres).astype(jnp.float32)


class MaskCachePallas:
    """JAX/Pallas port of the PyTorch MaskCache module."""

    def __init__(self, xyz_min, xyz_max, density, alpha_init, cache_thres, ks):
        self.xyz_min = jnp.asarray(xyz_min, jnp.float32)
        self.xyz_max = jnp.asarray(xyz_max, jnp.float32)
        self.mask_cache_thres = float(cache_thres)
        self.ks = int(ks)
        pad = self.ks // 2
        # F.max_pool3d(density, kernel_size=ks, padding=ks//2, stride=1)
        self.density = lax.reduce_window(
            jnp.asarray(density, jnp.float32), -jnp.inf, lax.max,
            window_dimensions=(1, 1, self.ks, self.ks, self.ks),
            window_strides=(1, 1, 1, 1, 1),
            padding=((0, 0), (0, 0), (pad, pad), (pad, pad), (pad, pad)))
        self.act_shift = float(np.log(1.0 / (1.0 - alpha_init) - 1.0))

        _, _, D, H, W = self.density.shape
        self.D, self.H, self.W = int(D), int(H), int(W)
        DH = self.D * self.H
        self.DH_pad = _round_up(DH, 8)
        self.W_pad = _round_up(max(self.W, 8), 8)

        # Lane-dense density layout: rows = d*H + h, cols = w, zero padded.
        dens_flat = self.density.reshape(DH, self.W)
        self.dens2 = (jnp.zeros((self.DH_pad, self.W_pad), jnp.float32)
                      .at[:DH, :self.W].set(dens_flat))

        # Compile-time constants for the voxel-space affine transform.
        xyz_min_np = np.asarray(xyz_min, np.float32).reshape(3)
        xyz_max_np = np.asarray(xyz_max, np.float32).reshape(3)
        sizes = np.array([self.D, self.H, self.W], np.float32)
        scale_np = (sizes - 1.0) / (xyz_max_np - xyz_min_np)
        offset_np = -xyz_min_np * scale_np
        self.scale = tuple(float(v) for v in scale_np)
        self.offset = tuple(float(v) for v in offset_np)

        # Tile size: 512 points per step (amortizes per-step overhead, keeps the
        # MXU lane dim full), clamped so the (DH_pad, TN) intermediates stay
        # well inside the scoped-VMEM budget.
        # TODO(synk): for very large grids (>= ~256^3) the (D*H, TN) intermediate
        # should additionally be tiled along the D*H axis.
        tn = 512
        while tn > 128 and 6 * self.DH_pad * tn * 4 > (20 << 20):
            tn //= 2
        self.TN = tn

        dens_vmem = self.DH_pad * _round_up(self.W_pad, 128) * 4
        per_tile = (6 * self.DH_pad * self.TN + 3 * self.W_pad * self.TN
                    + 16 * self.TN) * 4
        est = 2 * dens_vmem + 2 * per_tile
        self.vmem_limit = int(min(48 << 20, max(32 << 20, 2 * est)))

    def __call__(self, xyz):
        shape = xyz.shape[:-1]
        pts = jnp.asarray(xyz, jnp.float32).reshape(-1, 3)
        N = pts.shape[0]
        TN = self.TN
        num_tiles = max(1, (N + TN - 1) // TN)
        N_pad = num_tiles * TN
        # Transposed, lane-dense points: (3, N_pad).
        pts_t = jnp.zeros((3, N_pad), jnp.float32).at[:, :N].set(pts.T)

        kernel = functools.partial(
            _mask_cache_kernel, D=self.D, H=self.H, W=self.W,
            W_pad=self.W_pad, DH_pad=self.DH_pad,
            scale=self.scale, offset=self.offset,
            act_shift=self.act_shift, thres=self.mask_cache_thres)

        mask_f = pl.pallas_call(
            kernel,
            out_shape=jax.ShapeDtypeStruct((1, N_pad), jnp.float32),
            grid_spec=pltpu.PrefetchScalarGridSpec(
                num_scalar_prefetch=0,
                grid=(num_tiles,),
                in_specs=[
                    pl.BlockSpec((3, TN), lambda i: (0, i)),
                    pl.BlockSpec((self.DH_pad, self.W_pad), lambda i: (0, 0)),
                ],
                out_specs=pl.BlockSpec((1, TN), lambda i: (0, i)),
            ),
            compiler_params=pltpu.CompilerParams(
                dimension_semantics=("parallel",),
                vmem_limit_bytes=self.vmem_limit),
        )(pts_t, self.dens2)

        return (mask_f.reshape(-1)[:N] > 0.5).reshape(shape)


def _reference_forward(mc: MaskCachePallas, xyz):
    """Pure-JAX reference of the PyTorch forward (grid_sample trilinear)."""
    shape = xyz.shape[:-1]
    pts = jnp.asarray(xyz, jnp.float32).reshape(-1, 3)
    D, H, W = mc.D, mc.H, mc.W
    sizes = jnp.array([D, H, W], jnp.float32)
    f = (pts - mc.xyz_min) / (mc.xyz_max - mc.xyz_min) * (sizes - 1.0)
    f0 = jnp.floor(f)
    x0 = f0.astype(jnp.int32)
    frac = f - f0
    dens = mc.density[0, 0]
    samp = jnp.zeros((pts.shape[0],), jnp.float32)
    for a in (0, 1):
        for b in (0, 1):
            for c in (0, 1):
                off = jnp.array([a, b, c], jnp.int32)
                idx = x0 + off
                valid = jnp.all((idx >= 0) & (idx < jnp.array([D, H, W])), axis=-1)
                idxc = jnp.clip(idx, 0, jnp.array([D - 1, H - 1, W - 1]))
                val = dens[idxc[:, 0], idxc[:, 1], idxc[:, 2]]
                w = jnp.prod(jnp.where(off == 1, frac, 1.0 - frac), axis=-1)
                samp = samp + jnp.where(valid, w * val, 0.0)
    alpha = 1.0 - jnp.exp(-jnp.logaddexp(samp + mc.act_shift, 0.0))
    mask = (alpha >= mc.mask_cache_thres).reshape(shape)
    return mask, alpha.reshape(shape)


if __name__ == "__main__":
    key = jax.random.PRNGKey(0)
    k_dens, k_pts = jax.random.split(key)

    # Deterministic synthetic "parameters" (module __init__ arguments).
    xyz_min = jnp.array([-1.0, -1.0, -1.0], jnp.float32)
    xyz_max = jnp.array([1.0, 1.0, 1.0], jnp.float32)
    density = 2.0 * jax.random.normal(k_dens, (1, 1, 8, 8, 8), jnp.float32)
    alpha_init, cache_thres, ks = 1e-2, 1e-3, 3

    mc = MaskCachePallas(xyz_min, xyz_max, density, alpha_init, cache_thres, ks)

    # Query points, some slightly outside the box to exercise zero-padding.
    xyz = jax.random.uniform(k_pts, (2, 16, 16, 3), jnp.float32,
                             minval=-1.1, maxval=1.1)

    mask = mc(xyz)
    mask = jax.block_until_ready(mask)

    ref_mask, ref_alpha = _reference_forward(mc, xyz)
    ref_mask = jax.block_until_ready(ref_mask)

    assert mask.shape == xyz.shape[:-1] and mask.dtype == jnp.bool_.dtype
    # Allow differences only where alpha sits numerically on the threshold.
    agree = (mask == ref_mask) | (jnp.abs(ref_alpha - mc.mask_cache_thres) < 1e-5)
    assert bool(jnp.all(agree))

    print("KERNEL_OK")
</pallas_src>

<mosaic_0001>
module attributes {stable_mosaic.version = 11 : i64} {
  func.func @_mask_cache_kernel(%arg0: i32, %arg1: memref<3x512xf32, #tpu.memory_space<vmem>>, %arg2: memref<64x8xf32, #tpu.memory_space<vmem>>, %arg3: memref<1x512xf32, #tpu.memory_space<vmem>>) attributes {dimension_semantics = [#tpu.dimension_semantics<parallel>], iteration_bounds = array<i64: 1>, scalar_prefetch = 0 : i64, scratch_operands = 0 : i64, tpu.core_type = #tpu.core_type<tc>, window_params = [{transform_indices = @transform_0, window_bounds = array<i64: 3, 512>}, {pipeline_mode = #tpu.pipeline_mode<synchronous>, transform_indices = @transform_1, window_bounds = array<i64: 64, 8>}, {transform_indices = @transform_2, window_bounds = array<i64: 1, 512>}]} {
    %c0 = arith.constant 0 : index
    %c0_0 = arith.constant 0 : index
    %0 = vector.load %arg1[%c0, %c0_0] : memref<3x512xf32, #tpu.memory_space<vmem>>, vector<1x512xf32>
    %cst = arith.constant 3.500000e+00 : f32
    %1 = vector.broadcast %cst : f32 to vector<1x512xf32>
    %2 = arith.mulf %0, %1 : vector<1x512xf32>
    %cst_1 = arith.constant 3.500000e+00 : f32
    %3 = vector.broadcast %cst_1 : f32 to vector<1x512xf32>
    %4 = arith.addf %2, %3 : vector<1x512xf32>
    %c1 = arith.constant 1 : index
    %c0_2 = arith.constant 0 : index
    %5 = vector.load %arg1[%c1, %c0_2] : memref<3x512xf32, #tpu.memory_space<vmem>>, vector<1x512xf32>
    %cst_3 = arith.constant 3.500000e+00 : f32
    %6 = vector.broadcast %cst_3 : f32 to vector<1x512xf32>
    %7 = arith.mulf %5, %6 : vector<1x512xf32>
    %cst_4 = arith.constant 3.500000e+00 : f32
    %8 = vector.broadcast %cst_4 : f32 to vector<1x512xf32>
    %9 = arith.addf %7, %8 : vector<1x512xf32>
    %c2 = arith.constant 2 : index
    %c0_5 = arith.constant 0 : index
    %10 = vector.load %arg1[%c2, %c0_5] : memref<3x512xf32, #tpu.memory_space<vmem>>, vector<1x512xf32>
    %cst_6 = arith.constant 3.500000e+00 : f32
    %11 = vector.broadcast %cst_6 : f32 to vector<1x512xf32>
    %12 = arith.mulf %10, %11 : vector<1x512xf32>
    %cst_7 = arith.constant 3.500000e+00 : f32
    %13 = vector.broadcast %cst_7 : f32 to vector<1x512xf32>
    %14 = arith.addf %12, %13 : vector<1x512xf32>
    %15 = math.floor %4 : vector<1x512xf32>
    %16 = arith.fptosi %15 : vector<1x512xf32> to vector<1x512xi32>
    %17 = arith.subf %4, %15 : vector<1x512xf32>
    %cst_8 = arith.constant 1.000000e+00 : f32
    %18 = vector.broadcast %cst_8 : f32 to vector<1x512xf32>
    %19 = arith.subf %18, %17 : vector<1x512xf32>
    %c1_i32 = arith.constant 1 : i32
    %20 = vector.broadcast %c1_i32 : i32 to vector<1x512xi32>
    %21 = arith.addi %16, %20 : vector<1x512xi32>
    %c0_i32 = arith.constant 0 : i32
    %22 = vector.broadcast %c0_i32 : i32 to vector<1x512xi32>
    %23 = arith.cmpi sge, %16, %22 : vector<1x512xi32>
    %c8_i32 = arith.constant 8 : i32
    %24 = vector.broadcast %c8_i32 : i32 to vector<1x512xi32>
    %25 = arith.cmpi slt, %16, %24 : vector<1x512xi32>
    %26 = arith.andi %23, %25 : vector<1x512xi1>
    %c0_i32_9 = arith.constant 0 : i32
    %c7_i32 = arith.constant 7 : i32
    %27 = vector.broadcast %c0_i32_9 : i32 to vector<1x512xi32>
    %28 = arith.maxsi %27, %16 : vector<1x512xi32>
    %29 = vector.broadcast %c7_i32 : i32 to vector<1x512xi32>
    %30 = arith.minsi %29, %28 : vector<1x512xi32>
    %cst_10 = arith.constant 0.000000e+00 : f32
    %31 = vector.broadcast %cst_10 : f32 to vector<1x512xf32>
    %32 = arith.select %26, %19, %31 : vector<1x512xi1>, vector<1x512xf32>
    %c0_i32_11 = arith.constant 0 : i32
    %33 = vector.broadcast %c0_i32_11 : i32 to vector<1x512xi32>
    %34 = arith.cmpi sge, %21, %33 : vector<1x512xi32>
    %c8_i32_12 = arith.constant 8 : i32
    %35 = vector.broadcast %c8_i32_12 : i32 to vector<1x512xi32>
    %36 = arith.cmpi slt, %21, %35 : vector<1x512xi32>
    %37 = arith.andi %34, %36 : vector<1x512xi1>
    %c0_i32_13 = arith.constant 0 : i32
    %c7_i32_14 = arith.constant 7 : i32
    %38 = vector.broadcast %c0_i32_13 : i32 to vector<1x512xi32>
    %39 = arith.maxsi %38, %21 : vector<1x512xi32>
    %40 = vector.broadcast %c7_i32_14 : i32 to vector<1x512xi32>
    %41 = arith.minsi %40, %39 : vector<1x512xi32>
    %cst_15 = arith.constant 0.000000e+00 : f32
    %42 = vector.broadcast %cst_15 : f32 to vector<1x512xf32>
    %43 = arith.select %37, %17, %42 : vector<1x512xi1>, vector<1x512xf32>
    %44 = math.floor %9 : vector<1x512xf32>
    %45 = arith.fptosi %44 : vector<1x512xf32> to vector<1x512xi32>
    %46 = arith.subf %9, %44 : vector<1x512xf32>
    %cst_16 = arith.constant 1.000000e+00 : f32
    %47 = vector.broadcast %cst_16 : f32 to vector<1x512xf32>
    %48 = arith.subf %47, %46 : vector<1x512xf32>
    %c1_i32_17 = arith.constant 1 : i32
    %49 = vector.broadcast %c1_i32_17 : i32 to vector<1x512xi32>
    %50 = arith.addi %45, %49 : vector<1x512xi32>
    %c0_i32_18 = arith.constant 0 : i32
    %51 = vector.broadcast %c0_i32_18 : i32 to vector<1x512xi32>
    %52 = arith.cmpi sge, %45, %51 : vector<1x512xi32>
    %c8_i32_19 = arith.constant 8 : i32
    %53 = vector.broadcast %c8_i32_19 : i32 to vector<1x512xi32>
    %54 = arith.cmpi slt, %45, %53 : vector<1x512xi32>
    %55 = arith.andi %52, %54 : vector<1x512xi1>
    %c0_i32_20 = arith.constant 0 : i32
    %c7_i32_21 = arith.constant 7 : i32
    %56 = vector.broadcast %c0_i32_20 : i32 to vector<1x512xi32>
    %57 = arith.maxsi %56, %45 : vector<1x512xi32>
    %58 = vector.broadcast %c7_i32_21 : i32 to vector<1x512xi32>
    %59 = arith.minsi %58, %57 : vector<1x512xi32>
    %cst_22 = arith.constant 0.000000e+00 : f32
    %60 = vector.broadcast %cst_22 : f32 to vector<1x512xf32>
    %61 = arith.select %55, %48, %60 : vector<1x512xi1>, vector<1x512xf32>
    %c0_i32_23 = arith.constant 0 : i32
    %62 = vector.broadcast %c0_i32_23 : i32 to vector<1x512xi32>
    %63 = arith.cmpi sge, %50, %62 : vector<1x512xi32>
    %c8_i32_24 = arith.constant 8 : i32
    %64 = vector.broadcast %c8_i32_24 : i32 to vector<1x512xi32>
    %65 = arith.cmpi slt, %50, %64 : vector<1x512xi32>
    %66 = arith.andi %63, %65 : vector<1x512xi1>
    %c0_i32_25 = arith.constant 0 : i32
    %c7_i32_26 = arith.constant 7 : i32
    %67 = vector.broadcast %c0_i32_25 : i32 to vector<1x512xi32>
    %68 = arith.maxsi %67, %50 : vector<1x512xi32>
    %69 = vector.broadcast %c7_i32_26 : i32 to vector<1x512xi32>
    %70 = arith.minsi %69, %68 : vector<1x512xi32>
    %cst_27 = arith.constant 0.000000e+00 : f32
    %71 = vector.broadcast %cst_27 : f32 to vector<1x512xf32>
    %72 = arith.select %66, %46, %71 : vector<1x512xi1>, vector<1x512xf32>
    %73 = math.floor %14 : vector<1x512xf32>
    %74 = arith.fptosi %73 : vector<1x512xf32> to vector<1x512xi32>
    %75 = arith.subf %14, %73 : vector<1x512xf32>
    %cst_28 = arith.constant 1.000000e+00 : f32
    %76 = vector.broadcast %cst_28 : f32 to vector<1x512xf32>
    %77 = arith.subf %76, %75 : vector<1x512xf32>
    %c1_i32_29 = arith.constant 1 : i32
    %78 = vector.broadcast %c1_i32_29 : i32 to vector<1x512xi32>
    %79 = arith.addi %74, %78 : vector<1x512xi32>
    %c0_i32_30 = arith.constant 0 : i32
    %80 = vector.broadcast %c0_i32_30 : i32 to vector<1x512xi32>
    %81 = arith.cmpi sge, %74, %80 : vector<1x512xi32>
    %c8_i32_31 = arith.constant 8 : i32
    %82 = vector.broadcast %c8_i32_31 : i32 to vector<1x512xi32>
    %83 = arith.cmpi slt, %74, %82 : vector<1x512xi32>
    %84 = arith.andi %81, %83 : vector<1x512xi1>
    %c0_i32_32 = arith.constant 0 : i32
    %c7_i32_33 = arith.constant 7 : i32
    %85 = vector.broadcast %c0_i32_32 : i32 to vector<1x512xi32>
    %86 = arith.maxsi %85, %74 : vector<1x512xi32>
    %87 = vector.broadcast %c7_i32_33 : i32 to vector<1x512xi32>
    %88 = arith.minsi %87, %86 : vector<1x512xi32>
    %cst_34 = arith.constant 0.000000e+00 : f32
    %89 = vector.broadcast %cst_34 : f32 to vector<1x512xf32>
    %90 = arith.select %84, %77, %89 : vector<1x512xi1>, vector<1x512xf32>
    %c0_i32_35 = arith.constant 0 : i32
    %91 = vector.broadcast %c0_i32_35 : i32 to vector<1x512xi32>
    %92 = arith.cmpi sge, %79, %91 : vector<1x512xi32>
    %c8_i32_36 = arith.constant 8 : i32
    %93 = vector.broadcast %c8_i32_36 : i32 to vector<1x512xi32>
    %94 = arith.cmpi slt, %79, %93 : vector<1x512xi32>
    %95 = arith.andi %92, %94 : vector<1x512xi1>
    %c0_i32_37 = arith.constant 0 : i32
    %c7_i32_38 = arith.constant 7 : i32
    %96 = vector.broadcast %c0_i32_37 : i32 to vector<1x512xi32>
    %97 = arith.maxsi %96, %79 : vector<1x512xi32>
    %98 = vector.broadcast %c7_i32_38 : i32 to vector<1x512xi32>
    %99 = arith.minsi %98, %97 : vector<1x512xi32>
    %cst_39 = arith.constant 0.000000e+00 : f32
    %100 = vector.broadcast %cst_39 : f32 to vector<1x512xf32>
    %101 = arith.select %95, %75, %100 : vector<1x512xi1>, vector<1x512xf32>
    %102 = tpu.iota {dimensions = array<i32: 0>} : vector<8x1xi32>
    %103 = vector.broadcast %102 : vector<8x1xi32> to vector<8x512xi32>
    %104 = vector.broadcast %88 : vector<1x512xi32> to vector<8x512xi32>
    %105 = arith.cmpi eq, %103, %104 : vector<8x512xi32>
    %cst_40 = arith.constant 0.000000e+00 : f32
    %106 = vector.shape_cast %90 : vector<1x512xf32> to vector<1x512xf32>
    %107 = vector.broadcast %106 : vector<1x512xf32> to vector<8x512xf32>
    %108 = vector.broadcast %cst_40 : f32 to vector<8x512xf32>
    %109 = arith.select %105, %107, %108 : vector<8x512xi1>, vector<8x512xf32>
    %110 = vector.broadcast %102 : vector<8x1xi32> to vector<8x512xi32>
    %111 = vector.broadcast %99 : vector<1x512xi32> to vector<8x512xi32>
    %112 = arith.cmpi eq, %110, %111 : vector<8x512xi32>
    %cst_41 = arith.constant 0.000000e+00 : f32
    %113 = vector.shape_cast %101 : vector<1x512xf32> to vector<1x512xf32>
    %114 = vector.broadcast %113 : vector<1x512xf32> to vector<8x512xf32>
    %115 = vector.broadcast %cst_41 : f32 to vector<8x512xf32>
    %116 = arith.select %112, %114, %115 : vector<8x512xi1>, vector<8x512xf32>
    %117 = arith.addf %109, %116 : vector<8x512xf32>
    %c0_42 = arith.constant 0 : index
    %c0_43 = arith.constant 0 : index
    %118 = vector.load %arg2[%c0_42, %c0_43] : memref<64x8xf32, #tpu.memory_space<vmem>>, vector<64x8xf32>
    %cst_44 = arith.constant dense<0.000000e+00> : vector<64x512xf32>
    %119 = tpu.matmul %118, %117, %cst_44 {dimension_numbers = #tpu.dot_dimension_numbers<[1], [0], [0], [1], [0, 0, 1, 1], [], []>} : vector<64x8xf32>, vector<8x512xf32>, vector<64x512xf32> -> vector<64x512xf32>
    %120 = tpu.iota {dimensions = array<i32: 0>} : vector<64x1xi32>
    %cst_45 = arith.constant 0.000000e+00 : f32
    %121 = vector.broadcast %cst_45 : f32 to vector<64x512xf32>
    %c8_i32_46 = arith.constant 8 : i32
    %122 = vector.broadcast %c8_i32_46 : i32 to vector<1x512xi32>
    %123 = arith.muli %30, %122 : vector<1x512xi32>
    %124 = arith.addi %123, %59 : vector<1x512xi32>
    %125 = vector.broadcast %120 : vector<64x1xi32> to vector<64x512xi32>
    %126 = vector.broadcast %124 : vector<1x512xi32> to vector<64x512xi32>
    %127 = arith.cmpi eq, %125, %126 : vector<64x512xi32>
    %128 = arith.mulf %32, %61 : vector<1x512xf32>
    %cst_47 = arith.constant 0.000000e+00 : f32
    %129 = vector.shape_cast %128 : vector<1x512xf32> to vector<1x512xf32>
    %130 = vector.broadcast %129 : vector<1x512xf32> to vector<64x512xf32>
    %131 = vector.broadcast %cst_47 : f32 to vector<64x512xf32>
    %132 = arith.select %127, %130, %131 : vector<64x512xi1>, vector<64x512xf32>
    %133 = arith.addf %121, %132 : vector<64x512xf32>
    %c8_i32_48 = arith.constant 8 : i32
    %134 = vector.broadcast %c8_i32_48 : i32 to vector<1x512xi32>
    %135 = arith.muli %30, %134 : vector<1x512xi32>
    %136 = arith.addi %135, %70 : vector<1x512xi32>
    %137 = vector.broadcast %120 : vector<64x1xi32> to vector<64x512xi32>
    %138 = vector.broadcast %136 : vector<1x512xi32> to vector<64x512xi32>
    %139 = arith.cmpi eq, %137, %138 : vector<64x512xi32>
    %140 = arith.mulf %32, %72 : vector<1x512xf32>
    %cst_49 = arith.constant 0.000000e+00 : f32
    %141 = vector.shape_cast %140 : vector<1x512xf32> to vector<1x512xf32>
    %142 = vector.broadcast %141 : vector<1x512xf32> to vector<64x512xf32>
    %143 = vector.broadcast %cst_49 : f32 to vector<64x512xf32>
    %144 = arith.select %139, %142, %143 : vector<64x512xi1>, vector<64x512xf32>
    %145 = arith.addf %133, %144 : vector<64x512xf32>
    %c8_i32_50 = arith.constant 8 : i32
    %146 = vector.broadcast %c8_i32_50 : i32 to vector<1x512xi32>
    %147 = arith.muli %41, %146 : vector<1x512xi32>
    %148 = arith.addi %147, %59 : vector<1x512xi32>
    %149 = vector.broadcast %120 : vector<64x1xi32> to vector<64x512xi32>
    %150 = vector.broadcast %148 : vector<1x512xi32> to vector<64x512xi32>
    %151 = arith.cmpi eq, %149, %150 : vector<64x512xi32>
    %152 = arith.mulf %43, %61 : vector<1x512xf32>
    %cst_51 = arith.constant 0.000000e+00 : f32
    %153 = vector.shape_cast %152 : vector<1x512xf32> to vector<1x512xf32>
    %154 = vector.broadcast %153 : vector<1x512xf32> to vector<64x512xf32>
    %155 = vector.broadcast %cst_51 : f32 to vector<64x512xf32>
    %156 = arith.select %151, %154, %155 : vector<64x512xi1>, vector<64x512xf32>
    %157 = arith.addf %145, %156 : vector<64x512xf32>
    %c8_i32_52 = arith.constant 8 : i32
    %158 = vector.broadcast %c8_i32_52 : i32 to vector<1x512xi32>
    %159 = arith.muli %41, %158 : vector<1x512xi32>
    %160 = arith.addi %159, %70 : vector<1x512xi32>
    %161 = vector.broadcast %120 : vector<64x1xi32> to vector<64x512xi32>
    %162 = vector.broadcast %160 : vector<1x512xi32> to vector<64x512xi32>
    %163 = arith.cmpi eq, %161, %162 : vector<64x512xi32>
    %164 = arith.mulf %43, %72 : vector<1x512xf32>
    %cst_53 = arith.constant 0.000000e+00 : f32
    %165 = vector.shape_cast %164 : vector<1x512xf32> to vector<1x512xf32>
    %166 = vector.broadcast %165 : vector<1x512xf32> to vector<64x512xf32>
    %167 = vector.broadcast %cst_53 : f32 to vector<64x512xf32>
    %168 = arith.select %163, %166, %167 : vector<64x512xi1>, vector<64x512xf32>
    %169 = arith.addf %157, %168 : vector<64x512xf32>
    %170 = arith.mulf %119, %169 : vector<64x512xf32>
    %cst_54 = arith.constant dense<0.000000e+00> : vector<512xf32>
    %171 = vector.multi_reduction <add>, %170, %cst_54 [0] : vector<64x512xf32> to vector<512xf32>
    %172 = vector.shape_cast %171 : vector<512xf32> to vector<1x512xf32>
    %cst_55 = arith.constant -4.595120e+00 : f32
    %173 = vector.broadcast %cst_55 : f32 to vector<1x512xf32>
    %174 = arith.addf %172, %173 : vector<1x512xf32>
    %cst_56 = arith.constant 0.000000e+00 : f32
    %175 = vector.broadcast %cst_56 : f32 to vector<1x512xf32>
    %176 = arith.maximumf %174, %175 : vector<1x512xf32>
    %177 = vector.broadcast %cst_56 : f32 to vector<1x512xf32>
    %178 = arith.subf %174, %177 : vector<1x512xf32>
    %179 = arith.cmpf one, %178, %178 : vector<1x512xf32>
    %180 = vector.broadcast %cst_56 : f32 to vector<1x512xf32>
    %181 = arith.addf %174, %180 : vector<1x512xf32>
    %182 = math.absf %178 : vector<1x512xf32>
    %cst_57 = arith.constant 0.000000e+00 : f32
    %183 = vector.broadcast %cst_57 : f32 to vector<1x512xf32>
    %184 = arith.subf %183, %182 : vector<1x512xf32>
    %185 = math.exp %184 : vector<1x512xf32>
    %186 = math.log1p %185 : vector<1x512xf32>
    %187 = arith.addf %176, %186 : vector<1x512xf32>
    %188 = arith.select %179, %181, %187 : vector<1x512xi1>, vector<1x512xf32>
    %cst_58 = arith.constant 0.000000e+00 : f32
    %189 = vector.broadcast %cst_58 : f32 to vector<1x512xf32>
    %190 = arith.subf %189, %188 : vector<1x512xf32>
    %191 = math.exp %190 : vector<1x512xf32>
    %cst_59 = arith.constant 1.000000e+00 : f32
    %192 = vector.broadcast %cst_59 : f32 to vector<1x512xf32>
    %193 = arith.subf %192, %191 : vector<1x512xf32>
    %cst_60 = arith.constant 1.000000e-03 : f32
    %194 = vector.broadcast %cst_60 : f32 to vector<1x512xf32>
    %195 = arith.cmpf oge, %193, %194 : vector<1x512xf32>
    %196 = arith.extui %195 : vector<1x512xi1> to vector<1x512xi32>
    %197 = arith.sitofp %196 : vector<1x512xi32> to vector<1x512xf32>
    %c0_61 = arith.constant 0 : index
    %c0_62 = arith.constant 0 : index
    %198 = vector.load %arg3[%c0_61, %c0_62] : memref<1x512xf32, #tpu.memory_space<vmem>>, vector<1x512xf32>
    tpu.vector_store %arg3[%c0_61, %c0_62], %197 {strides = array<i32>} : memref<1x512xf32, #tpu.memory_space<vmem>>, vector<1x512xf32>,
    return
  }
  func.func @transform_0(%arg0: i32) -> (i32, i32) {
    %c0_i32 = arith.constant 0 : i32
    %c0_i32_0 = arith.constant 0 : i32
    return %c0_i32, %arg0 : i32, i32
  }
  func.func @transform_1(%arg0: i32) -> (i32, i32) {
    %c0_i32 = arith.constant 0 : i32
    %c0_i32_0 = arith.constant 0 : i32
    %c0_i32_1 = arith.constant 0 : i32
    return %c0_i32, %c0_i32_0 : i32, i32
  }
  func.func @transform_2(%arg0: i32) -> (i32, i32) {
    %c0_i32 = arith.constant 0 : i32
    %c0_i32_0 = arith.constant 0 : i32
    return %c0_i32, %arg0 : i32, i32
  }
}

</mosaic_0001>

<llo_original>
// kernel: tpu_custom_call.1
$region0: #{tpu_custom_call.1}
  #allocation0 [shape = 'u32[]', space=smem, size = 0x4, offset = 0x4, fixed_abs, tag = 'smem constant byte address 0x4 - core index']
  #allocation1 [shape = 'u32[144,128]{1,0:T(1,128)}', space=vmem, size = 0x12000, scoped, tag = 'internal scratch']
  %s0 = inlined_call_operand.vmem [shape: f32[3,512], index: 0, kind: input, shape index: {}]
  %s1 = inlined_call_operand.vmem [shape: f32[64,8], index: 1, kind: input, shape index: {}]
  %s2 = inlined_call_operand.hbm [shape: f32[1,512], index: 2, kind: output, shape index: {}]
  %s3 = sld [smem:[#allocation0]]
  $region18: #{tpu_custom_call.1} parent=0
    _
  %s5 = ssub.s32 1, %s3
  %s6 = scalar_select 0, %s5, %s3
  $region1: #{tpu_custom_call.1} parent=0
    #allocation2 [shape = 'u8[2048]{0}', space=vmem, size = 0x800, scoped, tag = 'output window, operand 0, single buffered']
    #allocation3 [shape = 's32[1]{0}', space=sflag, size = 0x4, scoped, tag = 'scoped memory for tpu_custom_call.1']
    %7 = vsyncpa [#allocation3], 0
    // Predicated region
    $region2: #{tpu_custom_call.1} parent=1 // pred_check
      _
    $region3: #{tpu_custom_call.1} parent=1 // pred_check_branch
      %9 = sbr.rel (0) target = $region5
    $region4: #{tpu_custom_call.1} parent=1 // pred_region
      _
    $region5: #{tpu_custom_call.1} parent=1 // pred_fallthru
      _
    // Predicated region
    $region6: #{tpu_custom_call.1} parent=1 // pred_check
      _
    $region7: #{tpu_custom_call.1} parent=1 // pred_check_branch
      %11 = sbr.rel (0) target = $region9
    $region8: #{tpu_custom_call.1} parent=1 // pred_region
      _
    $region9: #{tpu_custom_call.1} parent=1 // pred_fallthru
      _
    %v12 = vld [vmem:[%s0] ss:$4 sm:$0xf]
    %v13 = vmul.f32 %v12, 3.5
    %v14 = vadd.f32 %v13, 3.5
    %s15 = scalar_lea.vmem %s0, 1
    %v16 = vld [vmem:[%s15] ss:$4 sm:$0xf]
    %v17 = vmul.f32 %v16, 3.5
    %v18 = vadd.f32 %v17, 3.5
    %s19 = scalar_lea.vmem %s0, 2
    %v20 = vld [vmem:[%s19] ss:$4 sm:$0xf]
    %v21 = vmul.f32 %v20, 3.5
    %v22 = vadd.f32 %v21, 3.5
    %v23 = vfloor.f32 %v14
    %v24 = vcvt.f32.s32.to.zero.pseudo %v23
    %v25 = vsub.f32 %v14, %v23
    %v26 = vsub.f32 1.0, %v25
    %v27 = vadd.s32 %v24, 1
    %vm28 = vcmp.ge.s32.totalorder %v24, 0
    %vm29 = vcmp.lt.s32.totalorder %v24, 8
    %vm30 = vmand %vm28, %vm29
    %vm31 = vcmp.gt.s32.totalorder %v24, 0
    %v32 = vsel %vm31, %v24, 0
    %vm33 = vcmp.lt.s32.totalorder %v32, 7
    %v34 = vsel %vm33, %v32, 7
    %v35 = vsel %vm30, %v26, 0.0
    %vm36 = vcmp.ge.s32.totalorder %v27, 0
    %vm37 = vcmp.lt.s32.totalorder %v27, 8
    %vm38 = vmand %vm36, %vm37
    %vm39 = vcmp.gt.s32.totalorder %v27, 0
    %v40 = vsel %vm39, %v27, 0
    %vm41 = vcmp.lt.s32.totalorder %v40, 7
    %v42 = vsel %vm41, %v40, 7
    %v43 = vsel %vm38, %v25, 0.0
    %v44 = vfloor.f32 %v18
    %v45 = vcvt.f32.s32.to.zero.pseudo %v44
    %v46 = vsub.f32 %v18, %v44
    %v47 = vsub.f32 1.0, %v46
    %v48 = vadd.s32 %v45, 1
    %vm49 = vcmp.ge.s32.totalorder %v45, 0
    %vm50 = vcmp.lt.s32.totalorder %v45, 8
    %vm51 = vmand %vm49, %vm50
    %vm52 = vcmp.gt.s32.totalorder %v45, 0
    %v53 = vsel %vm52, %v45, 0
    %vm54 = vcmp.lt.s32.totalorder %v53, 7
    %v55 = vsel %vm54, %v53, 7
    %v56 = vsel %vm51, %v47, 0.0
    %vm57 = vcmp.ge.s32.totalorder %v48, 0
    %vm58 = vcmp.lt.s32.totalorder %v48, 8
    %vm59 = vmand %vm57, %vm58
    %vm60 = vcmp.gt.s32.totalorder %v48, 0
    %v61 = vsel %vm60, %v48, 0
    %vm62 = vcmp.lt.s32.totalorder %v61, 7
    %v63 = vsel %vm62, %v61, 7
    %v64 = vsel %vm59, %v46, 0.0
    %v65 = vfloor.f32 %v22
    %v66 = vcvt.f32.s32.to.zero.pseudo %v65
    %v67 = vsub.f32 %v22, %v65
    %v68 = vsub.f32 1.0, %v67
    %v69 = vadd.s32 %v66, 1
    %vm70 = vcmp.ge.s32.totalorder %v66, 0
    %vm71 = vcmp.lt.s32.totalorder %v66, 8
    %vm72 = vmand %vm70, %vm71
    %vm73 = vcmp.gt.s32.totalorder %v66, 0
    %v74 = vsel %vm73, %v66, 0
    %vm75 = vcmp.lt.s32.totalorder %v74, 7
    %v76 = vsel %vm75, %v74, 7
    %v77 = vsel %vm72, %v68, 0.0
    %vm78 = vcmp.ge.s32.totalorder %v69, 0
    %vm79 = vcmp.lt.s32.totalorder %v69, 8
    %vm80 = vmand %vm78, %vm79
    %vm81 = vcmp.gt.s32.totalorder %v69, 0
    %v82 = vsel %vm81, %v69, 0
    %vm83 = vcmp.lt.s32.totalorder %v82, 7
    %v84 = vsel %vm83, %v82, 7
    %v85 = vsel %vm80, %v67, 0.0
    %v86 = vlaneseq
    %v87 = vshrl.u32 %v86, 7
    %v88 = vlaneseq
    %v89 = vshrl.u32 %v88, 7
    %v90 = vsub.s32 0, %v89
    %v91 = vrot.slane %v76, %v90
    %v92 = vlaneseq
    %v93 = vshrl.u32 %v92, 7
    %v94 = vsub.s32 1, %v93
    %v95 = vrot.slane %v76, %v94
    %v96 = vlaneseq
    %v97 = vshrl.u32 %v96, 7
    %v98 = vsub.s32 2, %v97
    %v99 = vrot.slane %v76, %v98
    %v100 = vlaneseq
    %v101 = vshrl.u32 %v100, 7
    %v102 = vsub.s32 3, %v101
    %v103 = vrot.slane %v76, %v102
    %vm104 = vcmp.eq.s32.totalorder %v87, %v91
    %vm105 = vcmp.eq.s32.totalorder %v87, %v95
    %vm106 = vcmp.eq.s32.totalorder %v87, %v99
    %vm107 = vcmp.eq.s32.totalorder %v87, %v103
    %v109 = vlaneseq
    %v110 = vshrl.u32 %v109, 7
    %v111 = vsub.s32 0, %v110
    %v112 = vrot.slane %v77, %v111
    %v113 = vlaneseq
    %v114 = vshrl.u32 %v113, 7
    %v115 = vsub.s32 1, %v114
    %v116 = vrot.slane %v77, %v115
    %v117 = vlaneseq
    %v118 = vshrl.u32 %v117, 7
    %v119 = vsub.s32 2, %v118
    %v120 = vrot.slane %v77, %v119
    %v121 = vlaneseq
    %v122 = vshrl.u32 %v121, 7
    %v123 = vsub.s32 3, %v122
    %v124 = vrot.slane %v77, %v123
    %v129 = vsel %vm104, %v112, 0.0
    %v130 = vsel %vm105, %v116, 0.0
    %v131 = vsel %vm106, %v120, 0.0
    %v132 = vsel %vm107, %v124, 0.0
    %v133 = vlaneseq
    %v134 = vshrl.u32 %v133, 7
    %v135 = vsub.s32 0, %v134
    %v136 = vrot.slane %v84, %v135
    %v137 = vlaneseq
    %v138 = vshrl.u32 %v137, 7
    %v139 = vsub.s32 1, %v138
    %v140 = vrot.slane %v84, %v139
    %v141 = vlaneseq
    %v142 = vshrl.u32 %v141, 7
    %v143 = vsub.s32 2, %v142
    %v144 = vrot.slane %v84, %v143
    %v145 = vlaneseq
    %v146 = vshrl.u32 %v145, 7
    %v147 = vsub.s32 3, %v146
    %v148 = vrot.slane %v84, %v147
    %vm149 = vcmp.eq.s32.totalorder %v87, %v136
    %vm150 = vcmp.eq.s32.totalorder %v87, %v140
    %vm151 = vcmp.eq.s32.totalorder %v87, %v144
    %vm152 = vcmp.eq.s32.totalorder %v87, %v148
    %v154 = vlaneseq
    %v155 = vshrl.u32 %v154, 7
    %v156 = vsub.s32 0, %v155
    %v157 = vrot.slane %v85, %v156
    %v158 = vlaneseq
    %v159 = vshrl.u32 %v158, 7
    %v160 = vsub.s32 1, %v159
    %v161 = vrot.slane %v85, %v160
    %v162 = vlaneseq
    %v163 = vshrl.u32 %v162, 7
    %v164 = vsub.s32 2, %v163
    %v165 = vrot.slane %v85, %v164
    %v166 = vlaneseq
    %v167 = vshrl.u32 %v166, 7
    %v168 = vsub.s32 3, %v167
    %v169 = vrot.slane %v85, %v168
    %v174 = vsel %vm149, %v157, 0.0
    %v175 = vsel %vm150, %v161, 0.0
    %v176 = vsel %vm151, %v165, 0.0
    %v177 = vsel %vm152, %v169, 0.0
    %v178 = vadd.f32 %v129, %v174
    %v179 = vadd.f32 %v130, %v175
    %v180 = vadd.f32 %v131, %v176
    %v181 = vadd.f32 %v132, %v177
    %v182 = vld [vmem:[%s1] sm:$0xff]
    %v183 = vld [vmem:[%s1 + $0x8] sm:$0xff]
    %v184 = vld [vmem:[%s1 + $0x10] sm:$0xff]
    %v185 = vld [vmem:[%s1 + $0x18] sm:$0xff]
    %v186 = vld [vmem:[%s1 + $0x20] sm:$0xff]
    %v187 = vld [vmem:[%s1 + $0x28] sm:$0xff]
    %v188 = vld [vmem:[%s1 + $0x30] sm:$0xff]
    %v189 = vld [vmem:[%s1 + $0x38] sm:$0xff]
    %vm190 = vcmask 64512
    %v192 = vsel %vm190, %v182, 0
    %v195 = vsel %vm190, %v183, 0
    %v198 = vsel %vm190, %v184, 0
    %v201 = vsel %vm190, %v185, 0
    %v204 = vsel %vm190, %v186, 0
    %v207 = vsel %vm190, %v187, 0
    %v210 = vsel %vm190, %v188, 0
    %v213 = vsel %vm190, %v189, 0
    %215 = vmatprep.subr.mxu0 %v179
    %216 = vmatpush1.msra.mxu0 %v178
    %217 = vmatprep.subr.mxu0 0.0
    %218 = vmatpush1.msra.mxu0 0.0
    %219 = vmatprep.subr.mxu0 0.0
    %220 = vmatpush1.msra.mxu0 0.0
    %221 = vmatprep.subr.mxu0 0.0
    %222 = vmatpush1.msra.mxu0 0.0
    %223 = vmatprep.subr.mxu0 0.0
    %224 = vmatpush1.msra.mxu0 0.0
    %225 = vmatprep.subr.mxu0 0.0
    %226 = vmatpush1.msra.mxu0 0.0
    %227 = vmatprep.subr.mxu0 0.0
    %228 = vmatpush1.msra.mxu0 0.0
    %229 = vmatprep.subr.mxu0 0.0
    %230 = vmatpush1.msra.mxu0 0.0
    %231 = vmatprep.subr.mxu0 0.0
    %232 = vmatpush1.msra.mxu0 0.0
    %233 = vmatprep.subr.mxu0 0.0
    %234 = vmatpush1.msra.mxu0 0.0
    %235 = vmatprep.subr.mxu0 0.0
    %236 = vmatpush1.msra.mxu0 0.0
    %237 = vmatprep.subr.mxu0 0.0
    %238 = vmatpush1.msra.mxu0 0.0
    %239 = vmatprep.subr.mxu0 0.0
    %240 = vmatpush1.msra.mxu0 0.0
    %241 = vmatprep.subr.mxu0 0.0
    %242 = vmatpush1.msra.mxu0 0.0
    %243 = vmatprep.subr.mxu0 0.0
    %244 = vmatpush1.msra.mxu0 0.0
    %245 = vmatprep.subr.mxu0 0.0
    %246 = vmatpush1.msra.mxu0 0.0
    %247 = vmatprep.subr.mxu0 0.0
    %248 = vmatpush1.msra.mxu0 0.0
    %249 = vmatprep.subr.mxu0 0.0
    %250 = vmatpush1.msra.mxu0 0.0
    %251 = vmatprep.subr.mxu0 0.0
    %252 = vmatpush1.msra.mxu0 0.0
    %253 = vmatprep.subr.mxu0 0.0
    %254 = vmatpush1.msra.mxu0 0.0
    %255 = vmatprep.subr.mxu0 0.0
    %256 = vmatpush1.msra.mxu0 0.0
    %257 = vmatprep.subr.mxu0 0.0
    %258 = vmatpush1.msra.mxu0 0.0
    %259 = vmatprep.subr.mxu0 0.0
    %260 = vmatpush1.msra.mxu0 0.0
    %261 = vmatprep.subr.mxu0 0.0
    %262 = vmatpush1.msra.mxu0 0.0
    %263 = vmatprep.subr.mxu0 0.0
    %264 = vmatpush1.msra.mxu0 0.0
    %265 = vmatprep.subr.mxu0 0.0
    %266 = vmatpush1.msra.mxu0 0.0
    %267 = vmatprep.subr.mxu0 0.0
    %268 = vmatpush1.msra.mxu0 0.0
    %269 = vmatprep.subr.mxu0 0.0
    %270 = vmatpush1.msra.mxu0 0.0
    %271 = vmatprep.subr.mxu0 0.0
    %272 = vmatpush1.msra.mxu0 0.0
    %273 = vmatprep.subr.mxu0 0.0
    %274 = vmatpush1.msra.mxu0 0.0
    %275 = vmatprep.subr.mxu0 0.0
    %276 = vmatpush1.msra.mxu0 0.0
    %277 = vmatprep.subr.mxu0 0.0
    %278 = vmatpush1.msra.mxu0 0.0
    %279 = vmatprep.mubr.f32.mxu0 0.0
    %280 = vmatmul.mubr.f32.gmra.mrb[0].mxu0 %v192
    %v281 = vpop.f32.mrb[0].mxu0
    %v282 = vadd.f32 0.0, %v281
    %v283 = vpop.f32.mrb[0].mxu0
    %v284 = vadd.f32 0.0, %v283
    %285 = vmatprep.mubr.f32.mxu0 0.0
    %286 = vmatmul.mubr.f32.gmra.mrb[0].mxu0 %v195
    %v287 = vpop.f32.mrb[0].mxu0
    %v288 = vadd.f32 0.0, %v287
    %v289 = vpop.f32.mrb[0].mxu0
    %v290 = vadd.f32 0.0, %v289
    %291 = vmatprep.mubr.f32.mxu0 0.0
    %292 = vmatmul.mubr.f32.gmra.mrb[0].mxu0 %v198
    %v293 = vpop.f32.mrb[0].mxu0
    %v294 = vadd.f32 0.0, %v293
    %v295 = vpop.f32.mrb[0].mxu0
    %v296 = vadd.f32 0.0, %v295
    %297 = vmatprep.mubr.f32.mxu0 0.0
    %298 = vmatmul.mubr.f32.gmra.mrb[0].mxu0 %v201
    %v299 = vpop.f32.mrb[0].mxu0
    %v300 = vadd.f32 0.0, %v299
    %v301 = vpop.f32.mrb[0].mxu0
    %v302 = vadd.f32 0.0, %v301
    %303 = vmatprep.mubr.f32.mxu0 0.0
    %304 = vmatmul.mubr.f32.gmra.mrb[0].mxu0 %v204
    %v305 = vpop.f32.mrb[0].mxu0
    %v306 = vadd.f32 0.0, %v305
    %v307 = vpop.f32.mrb[0].mxu0
    %v308 = vadd.f32 0.0, %v307
    %309 = vmatprep.mubr.f32.mxu0 0.0
    %310 = vmatmul.mubr.f32.gmra.mrb[0].mxu0 %v207
    %v311 = vpop.f32.mrb[0].mxu0
    %v312 = vadd.f32 0.0, %v311
    %v313 = vpop.f32.mrb[0].mxu0
    %v314 = vadd.f32 0.0, %v313
    %315 = vmatprep.mubr.f32.mxu0 0.0
    %316 = vmatmul.mubr.f32.gmra.mrb[0].mxu0 %v210
    %v317 = vpop.f32.mrb[0].mxu0
    %v318 = vadd.f32 0.0, %v317
    %v319 = vpop.f32.mrb[0].mxu0
    %v320 = vadd.f32 0.0, %v319
    %321 = vmatprep.mubr.f32.mxu0 0.0
    %322 = vmatmul.mubr.f32.gmra.mrb[0].mxu0 %v213
    %v323 = vpop.f32.mrb[0].mxu0
    %v324 = vadd.f32 0.0, %v323
    %v325 = vpop.f32.mrb[0].mxu0
    %v326 = vadd.f32 0.0, %v325
    %327 = vdwg.mxu0
    %328 = vmatprep.subr.mxu0 %v181
    %329 = vmatpush1.msra.mxu0 %v180
    %330 = vmatprep.subr.mxu0 0.0
    %331 = vmatpush1.msra.mxu0 0.0
    %332 = vmatprep.subr.mxu0 0.0
    %333 = vmatpush1.msra.mxu0 0.0
    %334 = vmatprep.subr.mxu0 0.0
    %335 = vmatpush1.msra.mxu0 0.0
    %336 = vmatprep.subr.mxu0 0.0
    %337 = vmatpush1.msra.mxu0 0.0
    %338 = vmatprep.subr.mxu0 0.0
    %339 = vmatpush1.msra.mxu0 0.0
    %340 = vmatprep.subr.mxu0 0.0
    %341 = vmatpush1.msra.mxu0 0.0
    %342 = vmatprep.subr.mxu0 0.0
    %343 = vmatpush1.msra.mxu0 0.0
    %344 = vmatprep.subr.mxu0 0.0
    %345 = vmatpush1.msra.mxu0 0.0
    %346 = vmatprep.subr.mxu0 0.0
    %347 = vmatpush1.msra.mxu0 0.0
    %348 = vmatprep.subr.mxu0 0.0
    %349 = vmatpush1.msra.mxu0 0.0
    %350 = vmatprep.subr.mxu0 0.0
    %351 = vmatpush1.msra.mxu0 0.0
    %352 = vmatprep.subr.mxu0 0.0
    %353 = vmatpush1.msra.mxu0 0.0
    %354 = vmatprep.subr.mxu0 0.0
    %355 = vmatpush1.msra.mxu0 0.0
    %356 = vmatprep.subr.mxu0 0.0
    %357 = vmatpush1.msra.mxu0 0.0
    %358 = vmatprep.subr.mxu0 0.0
    %359 = vmatpush1.msra.mxu0 0.0
    %360 = vmatprep.subr.mxu0 0.0
    %361 = vmatpush1.msra.mxu0 0.0
    %362 = vmatprep.subr.mxu0 0.0
    %363 = vmatpush1.msra.mxu0 0.0
    %364 = vmatprep.subr.mxu0 0.0
    %365 = vmatpush1.msra.mxu0 0.0
    %366 = vmatprep.subr.mxu0 0.0
    %367 = vmatpush1.msra.mxu0 0.0
    %368 = vmatprep.subr.mxu0 0.0
    %369 = vmatpush1.msra.mxu0 0.0
    %370 = vmatprep.subr.mxu0 0.0
    %371 = vmatpush1.msra.mxu0 0.0
    %372 = vmatprep.subr.mxu0 0.0
    %373 = vmatpush1.msra.mxu0 0.0
    %374 = vmatprep.subr.mxu0 0.0
    %375 = vmatpush1.msra.mxu0 0.0
    %376 = vmatprep.subr.mxu0 0.0
    %377 = vmatpush1.msra.mxu0 0.0
    %378 = vmatprep.subr.mxu0 0.0
    %379 = vmatpush1.msra.mxu0 0.0
    %380 = vmatprep.subr.mxu0 0.0
    %381 = vmatpush1.msra.mxu0 0.0
    %382 = vmatprep.subr.mxu0 0.0
    %383 = vmatpush1.msra.mxu0 0.0
    %384 = vmatprep.subr.mxu0 0.0
    %385 = vmatpush1.msra.mxu0 0.0
    %386 = vmatprep.subr.mxu0 0.0
    %387 = vmatpush1.msra.mxu0 0.0
    %388 = vmatprep.subr.mxu0 0.0
    %389 = vmatpush1.msra.mxu0 0.0
    %390 = vmatprep.subr.mxu0 0.0
    %391 = vmatpush1.msra.mxu0 0.0
    %392 = vmatprep.mubr.f32.mxu0 0.0
    %393 = vmatmul.mubr.f32.gmra.mrb[0].mxu0 %v192
    %v394 = vpop.f32.mrb[0].mxu0
    %v395 = vadd.f32 0.0, %v394
    %v396 = vpop.f32.mrb[0].mxu0
    %v397 = vadd.f32 0.0, %v396
    %398 = vmatprep.mubr.f32.mxu0 0.0
    %399 = vmatmul.mubr.f32.gmra.mrb[0].mxu0 %v195
    %v400 = vpop.f32.mrb[0].mxu0
    %v401 = vadd.f32 0.0, %v400
    %v402 = vpop.f32.mrb[0].mxu0
    %v403 = vadd.f32 0.0, %v402
    %404 = vmatprep.mubr.f32.mxu0 0.0
    %405 = vmatmul.mubr.f32.gmra.mrb[0].mxu0 %v198
    %v406 = vpop.f32.mrb[0].mxu0
    %v407 = vadd.f32 0.0, %v406
    %v408 = vpop.f32.mrb[0].mxu0
    %v409 = vadd.f32 0.0, %v408
    %410 = vmatprep.mubr.f32.mxu0 0.0
    %411 = vmatmul.mubr.f32.gmra.mrb[0].mxu0 %v201
    %v412 = vpop.f32.mrb[0].mxu0
    %v413 = vadd.f32 0.0, %v412
    %v414 = vpop.f32.mrb[0].mxu0
    %v415 = vadd.f32 0.0, %v414
    %416 = vmatprep.mubr.f32.mxu0 0.0
    %417 = vmatmul.mubr.f32.gmra.mrb[0].mxu0 %v204
    %v418 = vpop.f32.mrb[0].mxu0
    %v419 = vadd.f32 0.0, %v418
    %v420 = vpop.f32.mrb[0].mxu0
    %v421 = vadd.f32 0.0, %v420
    %422 = vmatprep.mubr.f32.mxu0 0.0
    %423 = vmatmul.mubr.f32.gmra.mrb[0].mxu0 %v207
    %v424 = vpop.f32.mrb[0].mxu0
    %v425 = vadd.f32 0.0, %v424
    %v426 = vpop.f32.mrb[0].mxu0
    %v427 = vadd.f32 0.0, %v426
    %428 = vmatprep.mubr.f32.mxu0 0.0
    %429 = vmatmul.mubr.f32.gmra.mrb[0].mxu0 %v210
    %v430 = vpop.f32.mrb[0].mxu0
    %v431 = vadd.f32 0.0, %v430
    %v432 = vpop.f32.mrb[0].mxu0
    %v433 = vadd.f32 0.0, %v432
    %434 = vmatprep.mubr.f32.mxu0 0.0
    %435 = vmatmul.mubr.f32.gmra.mrb[0].mxu0 %v213
    %v436 = vpop.f32.mrb[0].mxu0
    %v437 = vadd.f32 0.0, %v436
    %v438 = vpop.f32.mrb[0].mxu0
    %v439 = vadd.f32 0.0, %v438
    %440 = vdwg.mxu0
    %v441 = vadd.s32 %v87, 8
    %v442 = vadd.s32 %v87, 16
    %v443 = vadd.s32 %v87, 24
    %v444 = vadd.s32 %v87, 32
    %v445 = vadd.s32 %v87, 40
    %v446 = vadd.s32 %v87, 48
    %v447 = vadd.s32 %v87, 56
    %v448 = vmul.u32 %v34, 8
    %v449 = vadd.s32 %v448, %v55
    %v450 = vlaneseq
    %v451 = vshrl.u32 %v450, 7
    %v452 = vsub.s32 0, %v451
    %v453 = vrot.slane %v449, %v452
    %v454 = vlaneseq
    %v455 = vshrl.u32 %v454, 7
    %v456 = vsub.s32 1, %v455
    %v457 = vrot.slane %v449, %v456
    %v458 = vlaneseq
    %v459 = vshrl.u32 %v458, 7
    %v460 = vsub.s32 2, %v459
    %v461 = vrot.slane %v449, %v460
    %v462 = vlaneseq
    %v463 = vshrl.u32 %v462, 7
    %v464 = vsub.s32 3, %v463
    %v465 = vrot.slane %v449, %v464
    %vm466 = vcmp.eq.s32.totalorder %v87, %v453
    %vm467 = vcmp.eq.s32.totalorder %v87, %v457
    %vm468 = vcmp.eq.s32.totalorder %v87, %v461
    %vm469 = vcmp.eq.s32.totalorder %v87, %v465
    %vm470 = vcmp.eq.s32.totalorder %v441, %v453
    %vm471 = vcmp.eq.s32.totalorder %v441, %v457
    %vm472 = vcmp.eq.s32.totalorder %v441, %v461
    %vm473 = vcmp.eq.s32.totalorder %v441, %v465
    %vm474 = vcmp.eq.s32.totalorder %v442, %v453
    %vm475 = vcmp.eq.s32.totalorder %v442, %v457
    %vm476 = vcmp.eq.s32.totalorder %v442, %v461
    %vm477 = vcmp.eq.s32.totalorder %v442, %v465
    %vm478 = vcmp.eq.s32.totalorder %v443, %v453
    %vm479 = vcmp.eq.s32.totalorder %v443, %v457
    %vm480 = vcmp.eq.s32.totalorder %v443, %v461
    %vm481 = vcmp.eq.s32.totalorder %v443, %v465
    %vm482 = vcmp.eq.s32.totalorder %v444, %v453
    %vm483 = vcmp.eq.s32.totalorder %v444, %v457
    %vm484 = vcmp.eq.s32.totalorder %v444, %v461
    %vm485 = vcmp.eq.s32.totalorder %v444, %v465
    %vm486 = vcmp.eq.s32.totalorder %v445, %v453
    %vm487 = vcmp.eq.s32.totalorder %v445, %v457
    %vm488 = vcmp.eq.s32.totalorder %v445, %v461
    %vm489 = vcmp.eq.s32.totalorder %v445, %v465
    %vm490 = vcmp.eq.s32.totalorder %v446, %v453
    %vm491 = vcmp.eq.s32.totalorder %v446, %v457
    %vm492 = vcmp.eq.s32.totalorder %v446, %v461
    %vm493 = vcmp.eq.s32.totalorder %v446, %v465
    %vm494 = vcmp.eq.s32.totalorder %v447, %v453
    %vm495 = vcmp.eq.s32.totalorder %v447, %v457
    %vm496 = vcmp.eq.s32.totalorder %v447, %v461
    %vm497 = vcmp.eq.s32.totalorder %v447, %v465
    %v498 = vmul.f32 %v35, %v56
    %v500 = vlaneseq
    %v501 = vshrl.u32 %v500, 7
    %v502 = vsub.s32 0, %v501
    %v503 = vrot.slane %v498, %v502
    %v504 = vlaneseq
    %v505 = vshrl.u32 %v504, 7
    %v506 = vsub.s32 1, %v505
    %v507 = vrot.slane %v498, %v506
    %v508 = vlaneseq
    %v509 = vshrl.u32 %v508, 7
    %v510 = vsub.s32 2, %v509
    %v511 = vrot.slane %v498, %v510
    %v512 = vlaneseq
    %v513 = vshrl.u32 %v512, 7
    %v514 = vsub.s32 3, %v513
    %v515 = vrot.slane %v498, %v514
    %v520 = vsel %vm466, %v503, 0.0
    %v521 = vsel %vm467, %v507, 0.0
    %v522 = vsel %vm468, %v511, 0.0
    %v523 = vsel %vm469, %v515, 0.0
    %v524 = vsel %vm470, %v503, 0.0
    %v525 = vsel %vm471, %v507, 0.0
    %v526 = vsel %vm472, %v511, 0.0
    %v527 = vsel %vm473, %v515, 0.0
    %v528 = vsel %vm474, %v503, 0.0
    %v529 = vsel %vm475, %v507, 0.0
    %v530 = vsel %vm476, %v511, 0.0
    %v531 = vsel %vm477, %v515, 0.0
    %v532 = vsel %vm478, %v503, 0.0
    %v533 = vsel %vm479, %v507, 0.0
    %v534 = vsel %vm480, %v511, 0.0
    %v535 = vsel %vm481, %v515, 0.0
    %v536 = vsel %vm482, %v503, 0.0
    %v537 = vsel %vm483, %v507, 0.0
    %v538 = vsel %vm484, %v511, 0.0
    %v539 = vsel %vm485, %v515, 0.0
    %v540 = vsel %vm486, %v503, 0.0
    %v541 = vsel %vm487, %v507, 0.0
    %v542 = vsel %vm488, %v511, 0.0
    %v543 = vsel %vm489, %v515, 0.0
    %v544 = vsel %vm490, %v503, 0.0
    %v545 = vsel %vm491, %v507, 0.0
    %v546 = vsel %vm492, %v511, 0.0
    %v547 = vsel %vm493, %v515, 0.0
    %v548 = vsel %vm494, %v503, 0.0
    %v549 = vsel %vm495, %v507, 0.0
    %v550 = vsel %vm496, %v511, 0.0
    %v551 = vsel %vm497, %v515, 0.0
    %v552 = vadd.f32 %v520, 0.0
    %v553 = vadd.f32 %v521, 0.0
    %v554 = vadd.f32 %v522, 0.0
    %v555 = vadd.f32 %v523, 0.0
    %v556 = vadd.f32 %v524, 0.0
    %v557 = vadd.f32 %v525, 0.0
    %v558 = vadd.f32 %v526, 0.0
    %v559 = vadd.f32 %v527, 0.0
    %v560 = vadd.f32 %v528, 0.0
    %v561 = vadd.f32 %v529, 0.0
    %v562 = vadd.f32 %v530, 0.0
    %v563 = vadd.f32 %v531, 0.0
    %v564 = vadd.f32 %v532, 0.0
    %v565 = vadd.f32 %v533, 0.0
    %v566 = vadd.f32 %v534, 0.0
    %v567 = vadd.f32 %v535, 0.0
    %v568 = vadd.f32 %v536, 0.0
    %v569 = vadd.f32 %v537, 0.0
    %v570 = vadd.f32 %v538, 0.0
    %v571 = vadd.f32 %v539, 0.0
    %v572 = vadd.f32 %v540, 0.0
    %v573 = vadd.f32 %v541, 0.0
    %v574 = vadd.f32 %v542, 0.0
    %v575 = vadd.f32 %v543, 0.0
    %v576 = vadd.f32 %v544, 0.0
    %v577 = vadd.f32 %v545, 0.0
    %v578 = vadd.f32 %v546, 0.0
    %v579 = vadd.f32 %v547, 0.0
    %v580 = vadd.f32 %v548, 0.0
    %v581 = vadd.f32 %v549, 0.0
    %v582 = vadd.f32 %v550, 0.0
    %v583 = vadd.f32 %v551, 0.0
    %v584 = vadd.s32 %v448, %v63
    %v585 = vlaneseq
    %v586 = vshrl.u32 %v585, 7
    %v587 = vsub.s32 0, %v586
    %v588 = vrot.slane %v584, %v587
    %v589 = vlaneseq
    %v590 = vshrl.u32 %v589, 7
    %v591 = vsub.s32 1, %v590
    %v592 = vrot.slane %v584, %v591
    %v593 = vlaneseq
    %v594 = vshrl.u32 %v593, 7
    %v595 = vsub.s32 2, %v594
    %v596 = vrot.slane %v584, %v595
    %v597 = vlaneseq
    %v598 = vshrl.u32 %v597, 7
    %v599 = vsub.s32 3, %v598
    %v600 = vrot.slane %v584, %v599
    %vm601 = vcmp.eq.s32.totalorder %v87, %v588
    %vm602 = vcmp.eq.s32.totalorder %v87, %v592
    %vm603 = vcmp.eq.s32.totalorder %v87, %v596
    %vm604 = vcmp.eq.s32.totalorder %v87, %v600
    %vm605 = vcmp.eq.s32.totalorder %v441, %v588
    %vm606 = vcmp.eq.s32.totalorder %v441, %v592
    %vm607 = vcmp.eq.s32.totalorder %v441, %v596
    %vm608 = vcmp.eq.s32.totalorder %v441, %v600
    %vm609 = vcmp.eq.s32.totalorder %v442, %v588
    %vm610 = vcmp.eq.s32.totalorder %v442, %v592
    %vm611 = vcmp.eq.s32.totalorder %v442, %v596
    %vm612 = vcmp.eq.s32.totalorder %v442, %v600
    %vm613 = vcmp.eq.s32.totalorder %v443, %v588
    %vm614 = vcmp.eq.s32.totalorder %v443, %v592
    %vm615 = vcmp.eq.s32.totalorder %v443, %v596
    %vm616 = vcmp.eq.s32.totalorder %v443, %v600
    %vm617 = vcmp.eq.s32.totalorder %v444, %v588
    %vm618 = vcmp.eq.s32.totalorder %v444, %v592
    %vm619 = vcmp.eq.s32.totalorder %v444, %v596
    %vm620 = vcmp.eq.s32.totalorder %v444, %v600
    %vm621 = vcmp.eq.s32.totalorder %v445, %v588
    %vm622 = vcmp.eq.s32.totalorder %v445, %v592
    %vm623 = vcmp.eq.s32.totalorder %v445, %v596
    %vm624 = vcmp.eq.s32.totalorder %v445, %v600
    %vm625 = vcmp.eq.s32.totalorder %v446, %v588
    %vm626 = vcmp.eq.s32.totalorder %v446, %v592
    %vm627 = vcmp.eq.s32.totalorder %v446, %v596
    %vm628 = vcmp.eq.s32.totalorder %v446, %v600
    %vm629 = vcmp.eq.s32.totalorder %v447, %v588
    %vm630 = vcmp.eq.s32.totalorder %v447, %v592
    %vm631 = vcmp.eq.s32.totalorder %v447, %v596
    %vm632 = vcmp.eq.s32.totalorder %v447, %v600
    %v633 = vmul.f32 %v35, %v64
    %v635 = vlaneseq
    %v636 = vshrl.u32 %v635, 7
    %v637 = vsub.s32 0, %v636
    %v638 = vrot.slane %v633, %v637
    %v639 = vlaneseq
    %v640 = vshrl.u32 %v639, 7
    %v641 = vsub.s32 1, %v640
    %v642 = vrot.slane %v633, %v641
    %v643 = vlaneseq
    %v644 = vshrl.u32 %v643, 7
    %v645 = vsub.s32 2, %v644
    %v646 = vrot.slane %v633, %v645
    %v647 = vlaneseq
    %v648 = vshrl.u32 %v647, 7
    %v649 = vsub.s32 3, %v648
    %v650 = vrot.slane %v633, %v649
    %v655 = vsel %vm601, %v638, 0.0
    %v656 = vsel %vm602, %v642, 0.0
    %v657 = vsel %vm603, %v646, 0.0
    %v658 = vsel %vm604, %v650, 0.0
    %v659 = vsel %vm605, %v638, 0.0
    %v660 = vsel %vm606, %v642, 0.0
    %v661 = vsel %vm607, %v646, 0.0
    %v662 = vsel %vm608, %v650, 0.0
    %v663 = vsel %vm609, %v638, 0.0
    %v664 = vsel %vm610, %v642, 0.0
    %v665 = vsel %vm611, %v646, 0.0
    %v666 = vsel %vm612, %v650, 0.0
    %v667 = vsel %vm613, %v638, 0.0
    %v668 = vsel %vm614, %v642, 0.0
    %v669 = vsel %vm615, %v646, 0.0
    %v670 = vsel %vm616, %v650, 0.0
    %v671 = vsel %vm617, %v638, 0.0
    %v672 = vsel %vm618, %v642, 0.0
    %v673 = vsel %vm619, %v646, 0.0
    %v674 = vsel %vm620, %v650, 0.0
    %v675 = vsel %vm621, %v638, 0.0
    %v676 = vsel %vm622, %v642, 0.0
    %v677 = vsel %vm623, %v646, 0.0
    %v678 = vsel %vm624, %v650, 0.0
    %v679 = vsel %vm625, %v638, 0.0
    %v680 = vsel %vm626, %v642, 0.0
    %v681 = vsel %vm627, %v646, 0.0
    %v682 = vsel %vm628, %v650, 0.0
    %v683 = vsel %vm629, %v638, 0.0
    %v684 = vsel %vm630, %v642, 0.0
    %v685 = vsel %vm631, %v646, 0.0
    %v686 = vsel %vm632, %v650, 0.0
    %v687 = vadd.f32 %v552, %v655
    %v688 = vadd.f32 %v553, %v656
    %v689 = vadd.f32 %v554, %v657
    %v690 = vadd.f32 %v555, %v658
    %v691 = vadd.f32 %v556, %v659
    %v692 = vadd.f32 %v557, %v660
    %v693 = vadd.f32 %v558, %v661
    %v694 = vadd.f32 %v559, %v662
    %v695 = vadd.f32 %v560, %v663
    %v696 = vadd.f32 %v561, %v664
    %v697 = vadd.f32 %v562, %v665
    %v698 = vadd.f32 %v563, %v666
    %v699 = vadd.f32 %v564, %v667
    %v700 = vadd.f32 %v565, %v668
    %v701 = vadd.f32 %v566, %v669
    %v702 = vadd.f32 %v567, %v670
    %v703 = vadd.f32 %v568, %v671
    %v704 = vadd.f32 %v569, %v672
    %v705 = vadd.f32 %v570, %v673
    %v706 = vadd.f32 %v571, %v674
    %v707 = vadd.f32 %v572, %v675
    %v708 = vadd.f32 %v573, %v676
    %v709 = vadd.f32 %v574, %v677
    %v710 = vadd.f32 %v575, %v678
    %v711 = vadd.f32 %v576, %v679
    %v712 = vadd.f32 %v577, %v680
    %v713 = vadd.f32 %v578, %v681
    %v714 = vadd.f32 %v579, %v682
    %v715 = vadd.f32 %v580, %v683
    %v716 = vadd.f32 %v581, %v684
    %v717 = vadd.f32 %v582, %v685
    %v718 = vadd.f32 %v583, %v686
    %v719 = vmul.u32 %v42, 8
    %v720 = vadd.s32 %v719, %v55
    %v721 = vlaneseq
    %v722 = vshrl.u32 %v721, 7
    %v723 = vsub.s32 0, %v722
    %v724 = vrot.slane %v720, %v723
    %v725 = vlaneseq
    %v726 = vshrl.u32 %v725, 7
    %v727 = vsub.s32 1, %v726
    %v728 = vrot.slane %v720, %v727
    %v729 = vlaneseq
    %v730 = vshrl.u32 %v729, 7
    %v731 = vsub.s32 2, %v730
    %v732 = vrot.slane %v720, %v731
    %v733 = vlaneseq
    %v734 = vshrl.u32 %v733, 7
    %v735 = vsub.s32 3, %v734
    %v736 = vrot.slane %v720, %v735
    %vm737 = vcmp.eq.s32.totalorder %v87, %v724
    %vm738 = vcmp.eq.s32.totalorder %v87, %v728
    %vm739 = vcmp.eq.s32.totalorder %v87, %v732
    %vm740 = vcmp.eq.s32.totalorder %v87, %v736
    %vm741 = vcmp.eq.s32.totalorder %v441, %v724
    %vm742 = vcmp.eq.s32.totalorder %v441, %v728
    %vm743 = vcmp.eq.s32.totalorder %v441, %v732
    %vm744 = vcmp.eq.s32.totalorder %v441, %v736
    %vm745 = vcmp.eq.s32.totalorder %v442, %v724
    %vm746 = vcmp.eq.s32.totalorder %v442, %v728
    %vm747 = vcmp.eq.s32.totalorder %v442, %v732
    %vm748 = vcmp.eq.s32.totalorder %v442, %v736
    %vm749 = vcmp.eq.s32.totalorder %v443, %v724
    %vm750 = vcmp.eq.s32.totalorder %v443, %v728
    %vm751 = vcmp.eq.s32.totalorder %v443, %v732
    %vm752 = vcmp.eq.s32.totalorder %v443, %v736
    %vm753 = vcmp.eq.s32.totalorder %v444, %v724
    %vm754 = vcmp.eq.s32.totalorder %v444, %v728
    %vm755 = vcmp.eq.s32.totalorder %v444, %v732
    %vm756 = vcmp.eq.s32.totalorder %v444, %v736
    %vm757 = vcmp.eq.s32.totalorder %v445, %v724
    %vm758 = vcmp.eq.s32.totalorder %v445, %v728
    %vm759 = vcmp.eq.s32.totalorder %v445, %v732
    %vm760 = vcmp.eq.s32.totalorder %v445, %v736
    %vm761 = vcmp.eq.s32.totalorder %v446, %v724
    %vm762 = vcmp.eq.s32.totalorder %v446, %v728
    %vm763 = vcmp.eq.s32.totalorder %v446, %v732
    %vm764 = vcmp.eq.s32.totalorder %v446, %v736
    %vm765 = vcmp.eq.s32.totalorder %v447, %v724
    %vm766 = vcmp.eq.s32.totalorder %v447, %v728
    %vm767 = vcmp.eq.s32.totalorder %v447, %v732
    %vm768 = vcmp.eq.s32.totalorder %v447, %v736
    %v769 = vmul.f32 %v43, %v56
    %v771 = vlaneseq
    %v772 = vshrl.u32 %v771, 7
    %v773 = vsub.s32 0, %v772
    %v774 = vrot.slane %v769, %v773
    %v775 = vlaneseq
    %v776 = vshrl.u32 %v775, 7
    %v777 = vsub.s32 1, %v776
    %v778 = vrot.slane %v769, %v777
    %v779 = vlaneseq
    %v780 = vshrl.u32 %v779, 7
    %v781 = vsub.s32 2, %v780
    %v782 = vrot.slane %v769, %v781
    %v783 = vlaneseq
    %v784 = vshrl.u32 %v783, 7
    %v785 = vsub.s32 3, %v784
    %v786 = vrot.slane %v769, %v785
    %v791 = vsel %vm737, %v774, 0.0
    %v792 = vsel %vm738, %v778, 0.0
    %v793 = vsel %vm739, %v782, 0.0
    %v794 = vsel %vm740, %v786, 0.0
    %v795 = vsel %vm741, %v774, 0.0
    %v796 = vsel %vm742, %v778, 0.0
    %v797 = vsel %vm743, %v782, 0.0
    %v798 = vsel %vm744, %v786, 0.0
    %v799 = vsel %vm745, %v774, 0.0
    %v800 = vsel %vm746, %v778, 0.0
    %v801 = vsel %vm747, %v782, 0.0
    %v802 = vsel %vm748, %v786, 0.0
    %v803 = vsel %vm749, %v774, 0.0
    %v804 = vsel %vm750, %v778, 0.0
    %v805 = vsel %vm751, %v782, 0.0
    %v806 = vsel %vm752, %v786, 0.0
    %v807 = vsel %vm753, %v774, 0.0
    %v808 = vsel %vm754, %v778, 0.0
    %v809 = vsel %vm755, %v782, 0.0
    %v810 = vsel %vm756, %v786, 0.0
    %v811 = vsel %vm757, %v774, 0.0
    %v812 = vsel %vm758, %v778, 0.0
    %v813 = vsel %vm759, %v782, 0.0
    %v814 = vsel %vm760, %v786, 0.0
    %v815 = vsel %vm761, %v774, 0.0
    %v816 = vsel %vm762, %v778, 0.0
    %v817 = vsel %vm763, %v782, 0.0
    %v818 = vsel %vm764, %v786, 0.0
    %v819 = vsel %vm765, %v774, 0.0
    %v820 = vsel %vm766, %v778, 0.0
    %v821 = vsel %vm767, %v782, 0.0
    %v822 = vsel %vm768, %v786, 0.0
    %v823 = vadd.f32 %v687, %v791
    %v824 = vadd.f32 %v688, %v792
    %v825 = vadd.f32 %v689, %v793
    %v826 = vadd.f32 %v690, %v794
    %v827 = vadd.f32 %v691, %v795
    %v828 = vadd.f32 %v692, %v796
    %v829 = vadd.f32 %v693, %v797
    %v830 = vadd.f32 %v694, %v798
    %v831 = vadd.f32 %v695, %v799
    %v832 = vadd.f32 %v696, %v800
    %v833 = vadd.f32 %v697, %v801
    %v834 = vadd.f32 %v698, %v802
    %v835 = vadd.f32 %v699, %v803
    %v836 = vadd.f32 %v700, %v804
    %v837 = vadd.f32 %v701, %v805
    %v838 = vadd.f32 %v702, %v806
    %v839 = vadd.f32 %v703, %v807
    %v840 = vadd.f32 %v704, %v808
    %v841 = vadd.f32 %v705, %v809
    %v842 = vadd.f32 %v706, %v810
    %v843 = vadd.f32 %v707, %v811
    %v844 = vadd.f32 %v708, %v812
    %v845 = vadd.f32 %v709, %v813
    %v846 = vadd.f32 %v710, %v814
    %v847 = vadd.f32 %v711, %v815
    %v848 = vadd.f32 %v712, %v816
    %v849 = vadd.f32 %v713, %v817
    %v850 = vadd.f32 %v714, %v818
    %v851 = vadd.f32 %v715, %v819
    %v852 = vadd.f32 %v716, %v820
    %v853 = vadd.f32 %v717, %v821
    %v854 = vadd.f32 %v718, %v822
    %v855 = vadd.s32 %v719, %v63
    %v856 = vlaneseq
    %v857 = vshrl.u32 %v856, 7
    %v858 = vsub.s32 0, %v857
    %v859 = vrot.slane %v855, %v858
    %v860 = vlaneseq
    %v861 = vshrl.u32 %v860, 7
    %v862 = vsub.s32 1, %v861
    %v863 = vrot.slane %v855, %v862
    %v864 = vlaneseq
    %v865 = vshrl.u32 %v864, 7
    %v866 = vsub.s32 2, %v865
    %v867 = vrot.slane %v855, %v866
    %v868 = vlaneseq
    %v869 = vshrl.u32 %v868, 7
    %v870 = vsub.s32 3, %v869
    %v871 = vrot.slane %v855, %v870
    %vm872 = vcmp.eq.s32.totalorder %v87, %v859
    %vm873 = vcmp.eq.s32.totalorder %v87, %v863
    %vm874 = vcmp.eq.s32.totalorder %v87, %v867
    %vm875 = vcmp.eq.s32.totalorder %v87, %v871
    %vm876 = vcmp.eq.s32.totalorder %v441, %v859
    %vm877 = vcmp.eq.s32.totalorder %v441, %v863
    %vm878 = vcmp.eq.s32.totalorder %v441, %v867
    %vm879 = vcmp.eq.s32.totalorder %v441, %v871
    %vm880 = vcmp.eq.s32.totalorder %v442, %v859
    %vm881 = vcmp.eq.s32.totalorder %v442, %v863
    %vm882 = vcmp.eq.s32.totalorder %v442, %v867
    %vm883 = vcmp.eq.s32.totalorder %v442, %v871
    %vm884 = vcmp.eq.s32.totalorder %v443, %v859
    %vm885 = vcmp.eq.s32.totalorder %v443, %v863
    %vm886 = vcmp.eq.s32.totalorder %v443, %v867
    %vm887 = vcmp.eq.s32.totalorder %v443, %v871
    %vm888 = vcmp.eq.s32.totalorder %v444, %v859
    %vm889 = vcmp.eq.s32.totalorder %v444, %v863
    %vm890 = vcmp.eq.s32.totalorder %v444, %v867
    %vm891 = vcmp.eq.s32.totalorder %v444, %v871
    %vm892 = vcmp.eq.s32.totalorder %v445, %v859
    %vm893 = vcmp.eq.s32.totalorder %v445, %v863
    %vm894 = vcmp.eq.s32.totalorder %v445, %v867
    %vm895 = vcmp.eq.s32.totalorder %v445, %v871
    %vm896 = vcmp.eq.s32.totalorder %v446, %v859
    %vm897 = vcmp.eq.s32.totalorder %v446, %v863
    %vm898 = vcmp.eq.s32.totalorder %v446, %v867
    %vm899 = vcmp.eq.s32.totalorder %v446, %v871
    %vm900 = vcmp.eq.s32.totalorder %v447, %v859
    %vm901 = vcmp.eq.s32.totalorder %v447, %v863
    %vm902 = vcmp.eq.s32.totalorder %v447, %v867
    %vm903 = vcmp.eq.s32.totalorder %v447, %v871
    %v904 = vmul.f32 %v43, %v64
    %v906 = vlaneseq
    %v907 = vshrl.u32 %v906, 7
    %v908 = vsub.s32 0, %v907
    %v909 = vrot.slane %v904, %v908
    %v910 = vlaneseq
    %v911 = vshrl.u32 %v910, 7
    %v912 = vsub.s32 1, %v911
    %v913 = vrot.slane %v904, %v912
    %v914 = vlaneseq
    %v915 = vshrl.u32 %v914, 7
    %v916 = vsub.s32 2, %v915
    %v917 = vrot.slane %v904, %v916
    %v918 = vlaneseq
    %v919 = vshrl.u32 %v918, 7
    %v920 = vsub.s32 3, %v919
    %v921 = vrot.slane %v904, %v920
    %v926 = vsel %vm872, %v909, 0.0
    %v927 = vsel %vm873, %v913, 0.0
    %v928 = vsel %vm874, %v917, 0.0
    %v929 = vsel %vm875, %v921, 0.0
    %v930 = vsel %vm876, %v909, 0.0
    %v931 = vsel %vm877, %v913, 0.0
    %v932 = vsel %vm878, %v917, 0.0
    %v933 = vsel %vm879, %v921, 0.0
    %v934 = vsel %vm880, %v909, 0.0
    %v935 = vsel %vm881, %v913, 0.0
    %v936 = vsel %vm882, %v917, 0.0
    %v937 = vsel %vm883, %v921, 0.0
    %v938 = vsel %vm884, %v909, 0.0
    %v939 = vsel %vm885, %v913, 0.0
    %v940 = vsel %vm886, %v917, 0.0
    %v941 = vsel %vm887, %v921, 0.0
    %v942 = vsel %vm888, %v909, 0.0
    %v943 = vsel %vm889, %v913, 0.0
    %v944 = vsel %vm890, %v917, 0.0
    %v945 = vsel %vm891, %v921, 0.0
    %v946 = vsel %vm892, %v909, 0.0
    %v947 = vsel %vm893, %v913, 0.0
    %v948 = vsel %vm894, %v917, 0.0
    %v949 = vsel %vm895, %v921, 0.0
    %v950 = vsel %vm896, %v909, 0.0
    %v951 = vsel %vm897, %v913, 0.0
    %v952 = vsel %vm898, %v917, 0.0
    %v953 = vsel %vm899, %v921, 0.0
    %v954 = vsel %vm900, %v909, 0.0
    %v955 = vsel %vm901, %v913, 0.0
    %v956 = vsel %vm902, %v917, 0.0
    %v957 = vsel %vm903, %v921, 0.0
    %v958 = vadd.f32 %v823, %v926
    %v959 = vadd.f32 %v824, %v927
    %v960 = vadd.f32 %v825, %v928
    %v961 = vadd.f32 %v826, %v929
    %v962 = vadd.f32 %v827, %v930
    %v963 = vadd.f32 %v828, %v931
    %v964 = vadd.f32 %v829, %v932
    %v965 = vadd.f32 %v830, %v933
    %v966 = vadd.f32 %v831, %v934
    %v967 = vadd.f32 %v832, %v935
    %v968 = vadd.f32 %v833, %v936
    %v969 = vadd.f32 %v834, %v937
    %v970 = vadd.f32 %v835, %v938
    %v971 = vadd.f32 %v836, %v939
    %v972 = vadd.f32 %v837, %v940
    %v973 = vadd.f32 %v838, %v941
    %v974 = vadd.f32 %v839, %v942
    %v975 = vadd.f32 %v840, %v943
    %v976 = vadd.f32 %v841, %v944
    %v977 = vadd.f32 %v842, %v945
    %v978 = vadd.f32 %v843, %v946
    %v979 = vadd.f32 %v844, %v947
    %v980 = vadd.f32 %v845, %v948
    %v981 = vadd.f32 %v846, %v949
    %v982 = vadd.f32 %v847, %v950
    %v983 = vadd.f32 %v848, %v951
    %v984 = vadd.f32 %v849, %v952
    %v985 = vadd.f32 %v850, %v953
    %v986 = vadd.f32 %v851, %v954
    %v987 = vadd.f32 %v852, %v955
    %v988 = vadd.f32 %v853, %v956
    %v989 = vadd.f32 %v854, %v957
    %v990 = vmul.f32 %v282, %v958
    %v991 = vmul.f32 %v284, %v959
    %v992 = vmul.f32 %v395, %v960
    %v993 = vmul.f32 %v397, %v961
    %v994 = vmul.f32 %v288, %v962
    %v995 = vmul.f32 %v290, %v963
    %v996 = vmul.f32 %v401, %v964
    %v997 = vmul.f32 %v403, %v965
    %v998 = vmul.f32 %v294, %v966
    %v999 = vmul.f32 %v296, %v967
    %v1000 = vmul.f32 %v407, %v968
    %v1001 = vmul.f32 %v409, %v969
    %v1002 = vmul.f32 %v300, %v970
    %v1003 = vmul.f32 %v302, %v971
    %v1004 = vmul.f32 %v413, %v972
    %v1005 = vmul.f32 %v415, %v973
    %v1006 = vmul.f32 %v306, %v974
    %v1007 = vmul.f32 %v308, %v975
    %v1008 = vmul.f32 %v419, %v976
    %v1009 = vmul.f32 %v421, %v977
    %v1010 = vmul.f32 %v312, %v978
    %v1011 = vmul.f32 %v314, %v979
    %v1012 = vmul.f32 %v425, %v980
    %v1013 = vmul.f32 %v427, %v981
    %v1014 = vmul.f32 %v318, %v982
    %v1015 = vmul.f32 %v320, %v983
    %v1016 = vmul.f32 %v431, %v984
    %v1017 = vmul.f32 %v433, %v985
    %v1018 = vmul.f32 %v324, %v986
    %v1019 = vmul.f32 %v326, %v987
    %v1020 = vmul.f32 %v437, %v988
    %v1021 = vmul.f32 %v439, %v989
    %v1022 = vadd.f32 %v990, %v994
    %v1023 = vadd.f32 %v1022, %v998
    %v1024 = vadd.f32 %v1023, %v1002
    %v1025 = vadd.f32 %v1024, %v1006
    %v1026 = vadd.f32 %v1025, %v1010
    %v1027 = vadd.f32 %v1026, %v1014
    %v1028 = vadd.f32 %v1027, %v1018
    %v1029 = vrot.slane %v1028, 4
    %v1030 = vadd.f32 %v1028, %v1029
    %v1031 = vrot.slane %v1030, 2
    %v1032 = vadd.f32 %v1030, %v1031
    %v1033 = vrot.slane %v1032, 1
    %v1034 = vadd.f32 %v1032, %v1033
    %v1035 = vadd.f32 %v991, %v995
    %v1036 = vadd.f32 %v1035, %v999
    %v1037 = vadd.f32 %v1036, %v1003
    %v1038 = vadd.f32 %v1037, %v1007
    %v1039 = vadd.f32 %v1038, %v1011
    %v1040 = vadd.f32 %v1039, %v1015
    %v1041 = vadd.f32 %v1040, %v1019
    %v1042 = vrot.slane %v1041, 4
    %v1043 = vadd.f32 %v1041, %v1042
    %v1044 = vrot.slane %v1043, 2
    %v1045 = vadd.f32 %v1043, %v1044
    %v1046 = vrot.slane %v1045, 1
    %v1047 = vadd.f32 %v1045, %v1046
    %v1048 = vadd.f32 %v992, %v996
    %v1049 = vadd.f32 %v1048, %v1000
    %v1050 = vadd.f32 %v1049, %v1004
    %v1051 = vadd.f32 %v1050, %v1008
    %v1052 = vadd.f32 %v1051, %v1012
    %v1053 = vadd.f32 %v1052, %v1016
    %v1054 = vadd.f32 %v1053, %v1020
    %v1055 = vrot.slane %v1054, 4
    %v1056 = vadd.f32 %v1054, %v1055
    %v1057 = vrot.slane %v1056, 2
    %v1058 = vadd.f32 %v1056, %v1057
    %v1059 = vrot.slane %v1058, 1
    %v1060 = vadd.f32 %v1058, %v1059
    %v1061 = vadd.f32 %v993, %v997
    %v1062 = vadd.f32 %v1061, %v1001
    %v1063 = vadd.f32 %v1062, %v1005
    %v1064 = vadd.f32 %v1063, %v1009
    %v1065 = vadd.f32 %v1064, %v1013
    %v1066 = vadd.f32 %v1065, %v1017
    %v1067 = vadd.f32 %v1066, %v1021
    %v1068 = vrot.slane %v1067, 4
    %v1069 = vadd.f32 %v1067, %v1068
    %v1070 = vrot.slane %v1069, 2
    %v1071 = vadd.f32 %v1069, %v1070
    %v1072 = vrot.slane %v1071, 1
    %v1073 = vadd.f32 %v1071, %v1072
    %v1074 = vadd.f32 %v1034, -4.59512
    %v1075 = vadd.f32 %v1047, -4.59512
    %v1076 = vadd.f32 %v1060, -4.59512
    %v1077 = vadd.f32 %v1073, -4.59512
    %v1078 = vmax.f32 %v1074, 0.0
    %v1079 = vmax.f32 %v1075, 0.0
    %v1080 = vmax.f32 %v1076, 0.0
    %v1081 = vmax.f32 %v1077, 0.0
    %vm1082 = vcmp.ne.f32.partialorder %v1074, %v1074
    %vm1083 = vcmp.ne.f32.partialorder %v1075, %v1075
    %vm1084 = vcmp.ne.f32.partialorder %v1076, %v1076
    %vm1085 = vcmp.ne.f32.partialorder %v1077, %v1077
    %v1086 = vadd.f32 %v1074, 0.0
    %v1087 = vadd.f32 %v1075, 0.0
    %v1088 = vadd.f32 %v1076, 0.0
    %v1089 = vadd.f32 %v1077, 0.0
    %v1090 = vand.u32 2147483647, %v1074
    %v1091 = vand.u32 2147483647, %v1075
    %v1092 = vand.u32 2147483647, %v1076
    %v1093 = vand.u32 2147483647, %v1077
    %v1094 = vsub.f32 0.0, %v1090
    %v1095 = vsub.f32 0.0, %v1091
    %v1096 = vsub.f32 0.0, %v1092
    %v1097 = vsub.f32 0.0, %v1093
    %v1098 = vmul.f32 %v1094, 1.442695
    %v1099 = vpow.pop %v1098
    %v1100 = vmul.f32 %v1095, 1.442695
    %v1101 = vpow.pop %v1100
    %v1102 = vmul.f32 %v1096, 1.442695
    %v1103 = vpow.pop %v1102
    %v1104 = vmul.f32 %v1097, 1.442695
    %v1105 = vpow.pop %v1104
    %v1106 = vadd.f32 %v1099, 1.0
    %v1107 = vlog2.pop %v1106
    %v1108 = vmul.f32 %v1107, 0.6931472
    %v1109 = vmul.f32 -0.5, %v1099
    %v1110 = vadd.f32 %v1109, 1.0
    %v1111 = vmul.f32 %v1110, %v1099
    %v1112 = vand.u32 2147483647, %v1099
    %vm1113 = vcmp.lt.f32.partialorder %v1112, 0.0004427343
    %v1114 = vsel %vm1113, %v1111, %v1108
    %v1115 = vadd.f32 %v1101, 1.0
    %v1116 = vlog2.pop %v1115
    %v1117 = vmul.f32 %v1116, 0.6931472
    %v1118 = vmul.f32 -0.5, %v1101
    %v1119 = vadd.f32 %v1118, 1.0
    %v1120 = vmul.f32 %v1119, %v1101
    %v1121 = vand.u32 2147483647, %v1101
    %vm1122 = vcmp.lt.f32.partialorder %v1121, 0.0004427343
    %v1123 = vsel %vm1122, %v1120, %v1117
    %v1124 = vadd.f32 %v1103, 1.0
    %v1125 = vlog2.pop %v1124
    %v1126 = vmul.f32 %v1125, 0.6931472
    %v1127 = vmul.f32 -0.5, %v1103
    %v1128 = vadd.f32 %v1127, 1.0
    %v1129 = vmul.f32 %v1128, %v1103
    %v1130 = vand.u32 2147483647, %v1103
    %vm1131 = vcmp.lt.f32.partialorder %v1130, 0.0004427343
    %v1132 = vsel %vm1131, %v1129, %v1126
    %v1133 = vadd.f32 %v1105, 1.0
    %v1134 = vlog2.pop %v1133
    %v1135 = vmul.f32 %v1134, 0.6931472
    %v1136 = vmul.f32 -0.5, %v1105
    %v1137 = vadd.f32 %v1136, 1.0
    %v1138 = vmul.f32 %v1137, %v1105
    %v1139 = vand.u32 2147483647, %v1105
    %vm1140 = vcmp.lt.f32.partialorder %v1139, 0.0004427343
    %v1141 = vsel %vm1140, %v1138, %v1135
    %v1142 = vadd.f32 %v1078, %v1114
    %v1143 = vadd.f32 %v1079, %v1123
    %v1144 = vadd.f32 %v1080, %v1132
    %v1145 = vadd.f32 %v1081, %v1141
    %v1146 = vsel %vm1082, %v1086, %v1142
    %v1147 = vsel %vm1083, %v1087, %v1143
    %v1148 = vsel %vm1084, %v1088, %v1144
    %v1149 = vsel %vm1085, %v1089, %v1145
    %v1150 = vsub.f32 0.0, %v1146
    %v1151 = vsub.f32 0.0, %v1147
    %v1152 = vsub.f32 0.0, %v1148
    %v1153 = vsub.f32 0.0, %v1149
    %v1154 = vmul.f32 %v1150, 1.442695
    %v1155 = vpow.pop %v1154
    %v1156 = vmul.f32 %v1151, 1.442695
    %v1157 = vpow.pop %v1156
    %v1158 = vmul.f32 %v1152, 1.442695
    %v1159 = vpow.pop %v1158
    %v1160 = vmul.f32 %v1153, 1.442695
    %v1161 = vpow.pop %v1160
    %v1162 = vsub.f32 1.0, %v1155
    %v1163 = vsub.f32 1.0, %v1157
    %v1164 = vsub.f32 1.0, %v1159
    %v1165 = vsub.f32 1.0, %v1161
    %vm1166 = vcmp.ge.f32.partialorder %v1162, 0.001
    %vm1167 = vcmp.ge.f32.partialorder %v1163, 0.001
    %vm1168 = vcmp.ge.f32.partialorder %v1164, 0.001
    %vm1169 = vcmp.ge.f32.partialorder %v1165, 0.001
    %v1170 = vsel %vm1166, 1, 0
    %v1171 = vsel %vm1167, 1, 0
    %v1172 = vsel %vm1168, 1, 0
    %v1173 = vsel %vm1169, 1, 0
    %v1174 = vcvt.s32.f32 %v1170
    %v1175 = vcvt.s32.f32 %v1171
    %v1176 = vcvt.s32.f32 %v1172
    %v1177 = vcvt.s32.f32 %v1173
    %v1182 = vcombine.low %v1174, %v1175
    %v1183 = vcombine.low %v1176, %v1177
    %v1185 = vunpack.c.l.s4 1966171168
    %v1186 = vunpack.c.0.s8 %v1185
    %v1187 = vlaneseq
    %v1188 = vshrl.u32 %v1187, 7
    %v1189 = vsub.s32 %v1186, %v1188
    %v1190 = vrot.slane %v1182, %v1189
    %v1192 = vunpack.c.l.s4 1966171168
    %v1193 = vunpack.c.0.s8 %v1192
    %v1194 = vlaneseq
    %v1195 = vshrl.u32 %v1194, 7
    %v1196 = vsub.s32 %v1193, %v1195
    %v1197 = vrot.slane %v1183, %v1196
    %v1198 = vcombine.low %v1190, %v1197
    %v1200 = vunpack.c.l.s4 1966171168
    %v1201 = vunpack.c.0.s8 %v1200
    %v1202 = vlaneseq
    %v1203 = vshrl.u32 %v1202, 7
    %v1204 = vsub.s32 %v1201, %v1203
    %v1205 = vrot.slane %v1198, %v1204
    %v1207 = vlaneseq
    %vm1208 = vcmp.ge.s32.totalorder %v1207, 0
    %vm1209 = vcmp.lt.s32.totalorder %v1207, 512
    %vm1210 = vmand %vm1208, %vm1209
    %1211 = vst.msk [vmem:[#allocation2] sm:$0xf] %vm1210, %v1205
    // Predicated region
    $region10: #{tpu_custom_call.1} parent=1 // pred_check
      _
    $region11: #{tpu_custom_call.1} parent=1 // pred_check_branch
      %1213 = sbr.rel (0) target = $region13
    $region12: #{tpu_custom_call.1} parent=1 // pred_region
      %s1215 = ssub.s32 64, 64
      %1216 = vsyncadd [#allocation3], %s1215
      %s1218 = sshll.u32 [#allocation2], 4
      %s1219 = int_to_ptr.vmem [resolvable:$true] %s1218
      %1221 = dma.vmem_to_hbm [thread:$0]  %s1219, 64, %s2, [#allocation3]
    $region13: #{tpu_custom_call.1} parent=1 // pred_fallthru
      _
    // Predicated region
    $region14: #{tpu_custom_call.1} parent=1 // pred_check
      _
    $region15: #{tpu_custom_call.1} parent=1 // pred_check_branch
      %1223 = sbr.rel (0) target = $region17
    $region16: #{tpu_custom_call.1} parent=1 // pred_region
      %1224 = dma.done [#allocation3], 64
    $region17: #{tpu_custom_call.1} parent=1 // pred_fallthru
      _
    %1225 = vsyncpa [#allocation3], 1

</llo_original>
